<compile_context>
chip_gen: v7x
topology: tpu7x:2x2x1
jax: 0.10.0
libtpu: 0.0.40
codegen_flags: <defaults>
</compile_context>

<pallas_src>
import jax
import jax.numpy as jnp
from jax import lax
from jax.experimental import pallas as pl
from jax.experimental.pallas import tpu as pltpu

LN_EPS = 1e-5


def lane_encoder_kernel(x_ref, w_ref, p_ref, o_ref):
    # x_ref: (TB*N, D) flattened waypoint rows
    # w_ref: (D, H)
    # p_ref: (3, H) packed [bias; gamma; beta]
    # o_ref: (TB, N*2H) lane-dense flat output rows
    rows, _ = x_ref.shape
    h = w_ref.shape[1]
    tb = o_ref.shape[0]
    n = rows // tb

    bias = p_ref[0:1, :]                                      # (1, H)
    gamma = p_ref[1:2, :]                                     # (1, H)
    beta = p_ref[2:3, :]                                      # (1, H)

    # ---- Linear: one fused (TB*N, D) @ (D, H) f32 matmul per grid step.
    hl = jnp.dot(x_ref[...], w_ref[...], preferred_element_type=jnp.float32)
    hl = hl + bias                                            # (rows, H)

    # ---- LayerNorm over features (biased variance, subtracted form).
    mean = jnp.mean(hl, axis=-1, keepdims=True)
    cent = hl - mean
    var = jnp.mean(cent * cent, axis=-1, keepdims=True)
    hn = cent * lax.rsqrt(var + LN_EPS)
    hn = hn * gamma + beta

    # ---- ReLU
    hn = jnp.maximum(hn, 0.0)                                 # (rows, H)

    # ---- max_pool1d over the N waypoints of each batch element.
    hn3 = hn.reshape(tb, n, h)                                # (TB, N, H)
    mx = jnp.max(hn3, axis=1, keepdims=True)                  # (TB, 1, H)
    mx_b = jnp.broadcast_to(mx, (tb, n, h))                   # (TB, N, H)

    # ---- Assemble [pooled_max, per_point] rows in vregs and issue ONE dense
    # full-width store (N*2H lanes = multiple of 128 -> unmasked vst).
    row = jnp.concatenate([mx_b, hn3], axis=-1)               # (TB, N, 2H)
    o_ref[...] = row.reshape(tb, n * 2 * h).astype(o_ref.dtype)


_ROW_CAP = 256            # vreg-pressure cap on register-resident (rows, H) math
_VMEM_BUDGET = 32 << 20   # portable scoped-VMEM ceiling (fits v7x's 64 MiB VMEM)


def _pick_batch_tile(batch, n, d, h):
    """Pick TB = batch elements per grid step.

    Rules: fewest grid steps (the grid is a serial loop on single-TC v5e/v6e,
    ~0.35us per step), subject to (a) <= _ROW_CAP rows of register-resident
    math, (b) double-buffered blocks within a portable VMEM budget, and
    (c) (8,128)-tileable blocks (TB == batch or TB % 8 == 0).  When more than
    one step is required, prefer an even step count so both v7x TensorCores
    get work on the 'parallel' grid axis.
    """
    def fits(tb):
        if not (tb == batch or tb % 8 == 0):
            return False
        rows = tb * n
        if rows > _ROW_CAP:
            return False
        bytes_per_step = 4 * (2 * rows * d           # double-buffered input
                              + 2 * tb * n * 2 * h   # double-buffered output
                              + d * h + 3 * h)       # weights + packed params
        return bytes_per_step <= _VMEM_BUDGET

    divisors = [t for t in range(1, batch + 1) if batch % t == 0]
    cands = [t for t in divisors if fits(t)] or [1]
    best = max(cands)                                 # fewest grid steps
    steps = batch // best
    if steps > 1 and steps % 2 == 1:
        even = [t for t in cands if (batch // t) % 2 == 0]
        if even:
            best = max(even)                          # even steps for v7x 2-TC
    return best


def lane_encoder(waypoints, w, b, gamma, beta):
    """waypoints: [B, N, D] f32 -> [B, N, 2H] f32 (matches LaneEncoder.forward)."""
    B, N, D = waypoints.shape
    H = w.shape[1]
    TB = _pick_batch_tile(B, N, D, H)

    x_flat = waypoints.reshape(B * N, D)              # contiguous, free reshape
    params = jnp.stack([b, gamma, beta], axis=0)      # (3, H): single input tile

    out_flat = pl.pallas_call(
        lane_encoder_kernel,
        out_shape=jax.ShapeDtypeStruct((B, N * 2 * H), jnp.float32),
        grid_spec=pltpu.PrefetchScalarGridSpec(
            num_scalar_prefetch=0,
            grid=(B // TB,),
            in_specs=[
                pl.BlockSpec((TB * N, D), lambda i: (i, 0)),
                pl.BlockSpec((D, H), lambda i: (0, 0)),
                pl.BlockSpec((3, H), lambda i: (0, 0)),
            ],
            out_specs=pl.BlockSpec((TB, N * 2 * H), lambda i: (i, 0)),
        ),
        compiler_params=pltpu.CompilerParams(
            dimension_semantics=("parallel",)),
    )(x_flat, w, params)
    # Free, contiguous reshape back to the module's [B, N, 2H] layout.
    return out_flat.reshape(B, N, 2 * H)


def lane_encoder_ref(waypoints, w, b, gamma, beta):
    """Pure-JAX reference mirroring the PyTorch forward exactly."""
    h = jnp.einsum("bnd,dh->bnh", waypoints, w) + b
    mean = jnp.mean(h, axis=-1, keepdims=True)
    var = jnp.mean((h - mean) ** 2, axis=-1, keepdims=True)
    hn = (h - mean) / jnp.sqrt(var + LN_EPS) * gamma + beta
    x = jnp.maximum(hn, 0.0)                                  # [B, N, H]
    mx = jnp.broadcast_to(jnp.max(x, axis=1, keepdims=True), x.shape)
    return jnp.concatenate([mx, x], axis=-1)                  # [B, N, 2H]


if __name__ == "__main__":
    # Small shapes consistent with the module: batch=4, n=8 waypoints,
    # waypoint_dim=16, hidden_size=32.
    B, N, D, H = 4, 8, 16, 32

    key = jax.random.PRNGKey(0)
    k_x, k_w, k_b = jax.random.split(key, 3)

    waypoints = jax.random.normal(k_x, (B, N, D), dtype=jnp.float32)

    # Deterministic parameter init (PyTorch-Linear-like uniform bound).
    bound = 1.0 / jnp.sqrt(jnp.float32(D))
    w = jax.random.uniform(k_w, (D, H), jnp.float32, -bound, bound)
    b = jax.random.uniform(k_b, (H,), jnp.float32, -bound, bound)
    gamma = jnp.ones((H,), jnp.float32)   # LayerNorm weight
    beta = jnp.zeros((H,), jnp.float32)   # LayerNorm bias

    out = jax.block_until_ready(lane_encoder(waypoints, w, b, gamma, beta))
    ref = jax.block_until_ready(lane_encoder_ref(waypoints, w, b, gamma, beta))

    assert out.shape == (B, N, 2 * H), out.shape
    max_err = float(jnp.max(jnp.abs(out - ref)))
    assert jnp.allclose(out, ref, atol=1e-4, rtol=1e-4), max_err
    print("KERNEL_OK")
</pallas_src>

<mosaic_0001>
module attributes {stable_mosaic.version = 11 : i64} {
  func.func @lane_encoder_kernel(%arg0: i32, %arg1: memref<32x16xf32, #tpu.memory_space<vmem>>, %arg2: memref<16x32xf32, #tpu.memory_space<vmem>>, %arg3: memref<3x32xf32, #tpu.memory_space<vmem>>, %arg4: memref<4x512xf32, #tpu.memory_space<vmem>>) attributes {dimension_semantics = [#tpu.dimension_semantics<parallel>], iteration_bounds = array<i64: 1>, scalar_prefetch = 0 : i64, scratch_operands = 0 : i64, tpu.core_type = #tpu.core_type<tc>, window_params = [{transform_indices = @transform_0, window_bounds = array<i64: 32, 16>}, {pipeline_mode = #tpu.pipeline_mode<synchronous>, transform_indices = @transform_1, window_bounds = array<i64: 16, 32>}, {pipeline_mode = #tpu.pipeline_mode<synchronous>, transform_indices = @transform_2, window_bounds = array<i64: 3, 32>}, {transform_indices = @transform_3, window_bounds = array<i64: 4, 512>}]} {
    %c0 = arith.constant 0 : index
    %c0_0 = arith.constant 0 : index
    %0 = vector.load %arg3[%c0, %c0_0] : memref<3x32xf32, #tpu.memory_space<vmem>>, vector<1x32xf32>
    %c1 = arith.constant 1 : index
    %c0_1 = arith.constant 0 : index
    %1 = vector.load %arg3[%c1, %c0_1] : memref<3x32xf32, #tpu.memory_space<vmem>>, vector<1x32xf32>
    %c2 = arith.constant 2 : index
    %c0_2 = arith.constant 0 : index
    %2 = vector.load %arg3[%c2, %c0_2] : memref<3x32xf32, #tpu.memory_space<vmem>>, vector<1x32xf32>
    %c0_3 = arith.constant 0 : index
    %c0_4 = arith.constant 0 : index
    %3 = vector.load %arg1[%c0_3, %c0_4] : memref<32x16xf32, #tpu.memory_space<vmem>>, vector<32x16xf32>
    %c0_5 = arith.constant 0 : index
    %c0_6 = arith.constant 0 : index
    %4 = vector.load %arg2[%c0_5, %c0_6] : memref<16x32xf32, #tpu.memory_space<vmem>>, vector<16x32xf32>
    %cst = arith.constant dense<0.000000e+00> : vector<32x32xf32>
    %5 = tpu.matmul %3, %4, %cst {dimension_numbers = #tpu.dot_dimension_numbers<[1], [0], [0], [1], [0, 0, 1, 1], [], []>} : vector<32x16xf32>, vector<16x32xf32>, vector<32x32xf32> -> vector<32x32xf32>
    %6 = vector.broadcast %0 : vector<1x32xf32> to vector<32x32xf32>
    %7 = arith.addf %5, %6 : vector<32x32xf32>
    %cst_7 = arith.constant dense<0.000000e+00> : vector<32xf32>
    %8 = vector.multi_reduction <add>, %7, %cst_7 [1] : vector<32x32xf32> to vector<32xf32>
    %9 = vector.shape_cast %8 : vector<32xf32> to vector<32x1xf32>
    %cst_8 = arith.constant 3.200000e+01 : f32
    %10 = vector.broadcast %cst_8 : f32 to vector<32x1xf32>
    %11 = arith.divf %9, %10 : vector<32x1xf32>
    %12 = vector.broadcast %11 : vector<32x1xf32> to vector<32x32xf32>
    %13 = arith.subf %7, %12 : vector<32x32xf32>
    %14 = arith.mulf %13, %13 : vector<32x32xf32>
    %cst_9 = arith.constant dense<0.000000e+00> : vector<32xf32>
    %15 = vector.multi_reduction <add>, %14, %cst_9 [1] : vector<32x32xf32> to vector<32xf32>
    %16 = vector.shape_cast %15 : vector<32xf32> to vector<32x1xf32>
    %cst_10 = arith.constant 3.200000e+01 : f32
    %17 = vector.broadcast %cst_10 : f32 to vector<32x1xf32>
    %18 = arith.divf %16, %17 : vector<32x1xf32>
    %cst_11 = arith.constant 9.99999974E-6 : f32
    %19 = vector.broadcast %cst_11 : f32 to vector<32x1xf32>
    %20 = arith.addf %18, %19 : vector<32x1xf32>
    %21 = math.rsqrt %20 : vector<32x1xf32>
    %22 = vector.broadcast %21 : vector<32x1xf32> to vector<32x32xf32>
    %23 = arith.mulf %13, %22 : vector<32x32xf32>
    %24 = vector.broadcast %1 : vector<1x32xf32> to vector<32x32xf32>
    %25 = arith.mulf %23, %24 : vector<32x32xf32>
    %26 = vector.broadcast %2 : vector<1x32xf32> to vector<32x32xf32>
    %27 = arith.addf %25, %26 : vector<32x32xf32>
    %cst_12 = arith.constant 0.000000e+00 : f32
    %28 = vector.broadcast %cst_12 : f32 to vector<32x32xf32>
    %29 = arith.maximumf %27, %28 : vector<32x32xf32>
    %30 = vector.shape_cast %29 : vector<32x32xf32> to vector<4x8x32xf32>
    %cst_13 = arith.constant dense<0xFF800000> : vector<4x32xf32>
    %31 = vector.multi_reduction <maximumf>, %30, %cst_13 [1] : vector<4x8x32xf32> to vector<4x32xf32>
    %32 = vector.shape_cast %31 : vector<4x32xf32> to vector<4x1x32xf32>
    %33 = vector.shape_cast %32 : vector<4x1x32xf32> to vector<4x1x32xf32>
    %34 = vector.broadcast %33 : vector<4x1x32xf32> to vector<4x8x32xf32>
    %35 = tpu.concatenate %34, %30 in 2 : vector<4x8x32xf32>, vector<4x8x32xf32> -> vector<4x8x64xf32>
    %36 = vector.shape_cast %35 : vector<4x8x64xf32> to vector<4x512xf32>
    %c0_14 = arith.constant 0 : index
    %c0_15 = arith.constant 0 : index
    %37 = vector.load %arg4[%c0_14, %c0_15] : memref<4x512xf32, #tpu.memory_space<vmem>>, vector<4x512xf32>
    tpu.vector_store %arg4[%c0_14, %c0_15], %36 {strides = array<i32>} : memref<4x512xf32, #tpu.memory_space<vmem>>, vector<4x512xf32>,
    return
  }
  func.func @transform_0(%arg0: i32) -> (i32, i32) {
    %c0_i32 = arith.constant 0 : i32
    %c0_i32_0 = arith.constant 0 : i32
    return %arg0, %c0_i32 : i32, i32
  }
  func.func @transform_1(%arg0: i32) -> (i32, i32) {
    %c0_i32 = arith.constant 0 : i32
    %c0_i32_0 = arith.constant 0 : i32
    %c0_i32_1 = arith.constant 0 : i32
    return %c0_i32, %c0_i32_0 : i32, i32
  }
  func.func @transform_2(%arg0: i32) -> (i32, i32) {
    %c0_i32 = arith.constant 0 : i32
    %c0_i32_0 = arith.constant 0 : i32
    %c0_i32_1 = arith.constant 0 : i32
    return %c0_i32, %c0_i32_0 : i32, i32
  }
  func.func @transform_3(%arg0: i32) -> (i32, i32) {
    %c0_i32 = arith.constant 0 : i32
    %c0_i32_0 = arith.constant 0 : i32
    return %arg0, %c0_i32 : i32, i32
  }
}

</mosaic_0001>

<llo_original>
// kernel: tpu_custom_call.1
$region0: #{tpu_custom_call.1}
  #allocation0 [shape = 'u32[]', space=smem, size = 0x4, offset = 0x4, fixed_abs, tag = 'smem constant byte address 0x4 - core index']
  #allocation1 [shape = 'u32[144,128]{1,0:T(1,128)}', space=vmem, size = 0x12000, scoped, tag = 'internal scratch']
  %s0 = inlined_call_operand.vmem [shape: f32[32,16], index: 0, kind: input, shape index: {}]
  %s1 = inlined_call_operand.vmem [shape: f32[16,32], index: 1, kind: input, shape index: {}]
  %s2 = inlined_call_operand.vmem [shape: f32[3,32], index: 2, kind: input, shape index: {}]
  %s3 = inlined_call_operand.hbm [shape: f32[4,512], index: 3, kind: output, shape index: {}]
  %s4 = sld [smem:[#allocation0]]
  $region22: #{tpu_custom_call.1} parent=0
    _
  %s6 = ssub.s32 1, %s4
  %s7 = scalar_select 0, %s6, %s4
  $region1: #{tpu_custom_call.1} parent=0
    #allocation2 [shape = 'u8[8192]{0}', space=vmem, size = 0x2000, scoped, tag = 'output window, operand 0, single buffered']
    #allocation3 [shape = 's32[1]{0}', space=sflag, size = 0x4, scoped, tag = 'scoped memory for tpu_custom_call.1']
    %8 = vsyncpa [#allocation3], 0
    // Predicated region
    $region2: #{tpu_custom_call.1} parent=1 // pred_check
      _
    $region3: #{tpu_custom_call.1} parent=1 // pred_check_branch
      %10 = sbr.rel (0) target = $region5
    $region4: #{tpu_custom_call.1} parent=1 // pred_region
      _
    $region5: #{tpu_custom_call.1} parent=1 // pred_fallthru
      _
    // Predicated region
    $region6: #{tpu_custom_call.1} parent=1 // pred_check
      _
    $region7: #{tpu_custom_call.1} parent=1 // pred_check_branch
      %12 = sbr.rel (0) target = $region9
    $region8: #{tpu_custom_call.1} parent=1 // pred_region
      _
    $region9: #{tpu_custom_call.1} parent=1 // pred_fallthru
      _
    // Predicated region
    $region10: #{tpu_custom_call.1} parent=1 // pred_check
      _
    $region11: #{tpu_custom_call.1} parent=1 // pred_check_branch
      %14 = sbr.rel (0) target = $region13
    $region12: #{tpu_custom_call.1} parent=1 // pred_region
      _
    $region13: #{tpu_custom_call.1} parent=1 // pred_fallthru
      _
    %v15 = vld [vmem:[%s2] sm:$0x1]
    %v16 = vld [vmem:[%s2 + $0x1] sm:$0x1]
    %v17 = vld [vmem:[%s2 + $0x2] sm:$0x1]
    %v18 = vld [vmem:[%s0] sm:$0xff]
    %v19 = vld [vmem:[%s0 + $0x8] sm:$0xff]
    %v20 = vld [vmem:[%s0 + $0x10] sm:$0xff]
    %v21 = vld [vmem:[%s0 + $0x18] sm:$0xff]
    %v22 = vld [vmem:[%s1] sm:$0xff]
    %v23 = vld [vmem:[%s1 + $0x8] sm:$0xff]
    %v24 = vlaneseq
    %v25 = vshrl.u32 %v24, 7
    %v26 = vsub.s32 0, %v25
    %v27 = vrot.slane %v15, %v26
    %vm28 = vcmask 130048
    %v30 = vsel %vm28, %v18, 0
    %v33 = vsel %vm28, %v19, 0
    %v36 = vsel %vm28, %v20, 0
    %v39 = vsel %vm28, %v21, 0
    %41 = vmatprep.subr.mxu0 0.0
    %42 = vmatpush1.msra.mxu0 %v22
    %43 = vmatprep.subr.mxu0 0.0
    %44 = vmatpush1.msra.mxu0 %v23
    %45 = vmatprep.subr.mxu0 0.0
    %46 = vmatpush1.msra.mxu0 0.0
    %47 = vmatprep.subr.mxu0 0.0
    %48 = vmatpush1.msra.mxu0 0.0
    %49 = vmatprep.subr.mxu0 0.0
    %50 = vmatpush1.msra.mxu0 0.0
    %51 = vmatprep.subr.mxu0 0.0
    %52 = vmatpush1.msra.mxu0 0.0
    %53 = vmatprep.subr.mxu0 0.0
    %54 = vmatpush1.msra.mxu0 0.0
    %55 = vmatprep.subr.mxu0 0.0
    %56 = vmatpush1.msra.mxu0 0.0
    %57 = vmatprep.subr.mxu0 0.0
    %58 = vmatpush1.msra.mxu0 0.0
    %59 = vmatprep.subr.mxu0 0.0
    %60 = vmatpush1.msra.mxu0 0.0
    %61 = vmatprep.subr.mxu0 0.0
    %62 = vmatpush1.msra.mxu0 0.0
    %63 = vmatprep.subr.mxu0 0.0
    %64 = vmatpush1.msra.mxu0 0.0
    %65 = vmatprep.subr.mxu0 0.0
    %66 = vmatpush1.msra.mxu0 0.0
    %67 = vmatprep.subr.mxu0 0.0
    %68 = vmatpush1.msra.mxu0 0.0
    %69 = vmatprep.subr.mxu0 0.0
    %70 = vmatpush1.msra.mxu0 0.0
    %71 = vmatprep.subr.mxu0 0.0
    %72 = vmatpush1.msra.mxu0 0.0
    %73 = vmatprep.subr.mxu0 0.0
    %74 = vmatpush1.msra.mxu0 0.0
    %75 = vmatprep.subr.mxu0 0.0
    %76 = vmatpush1.msra.mxu0 0.0
    %77 = vmatprep.subr.mxu0 0.0
    %78 = vmatpush1.msra.mxu0 0.0
    %79 = vmatprep.subr.mxu0 0.0
    %80 = vmatpush1.msra.mxu0 0.0
    %81 = vmatprep.subr.mxu0 0.0
    %82 = vmatpush1.msra.mxu0 0.0
    %83 = vmatprep.subr.mxu0 0.0
    %84 = vmatpush1.msra.mxu0 0.0
    %85 = vmatprep.subr.mxu0 0.0
    %86 = vmatpush1.msra.mxu0 0.0
    %87 = vmatprep.subr.mxu0 0.0
    %88 = vmatpush1.msra.mxu0 0.0
    %89 = vmatprep.subr.mxu0 0.0
    %90 = vmatpush1.msra.mxu0 0.0
    %91 = vmatprep.subr.mxu0 0.0
    %92 = vmatpush1.msra.mxu0 0.0
    %93 = vmatprep.subr.mxu0 0.0
    %94 = vmatpush1.msra.mxu0 0.0
    %95 = vmatprep.subr.mxu0 0.0
    %96 = vmatpush1.msra.mxu0 0.0
    %97 = vmatprep.subr.mxu0 0.0
    %98 = vmatpush1.msra.mxu0 0.0
    %99 = vmatprep.subr.mxu0 0.0
    %100 = vmatpush1.msra.mxu0 0.0
    %101 = vmatprep.subr.mxu0 0.0
    %102 = vmatpush1.msra.mxu0 0.0
    %103 = vmatprep.subr.mxu0 0.0
    %104 = vmatpush1.msra.mxu0 0.0
    %105 = vmatprep.mubr.f32.mxu0 0.0
    %106 = vmatmul.mubr.f32.gmra.mrb[0].mxu0 %v30
    %v107 = vpop.f32.mrb[0].mxu0
    %v108 = vadd.f32 %v27, %v107
    %v109 = vpop.f32.mrb[0].mxu0
    %110 = vmatprep.mubr.f32.mxu0 0.0
    %111 = vmatmul.mubr.f32.gmra.mrb[0].mxu0 %v33
    %v112 = vpop.f32.mrb[0].mxu0
    %v113 = vadd.f32 %v27, %v112
    %v114 = vpop.f32.mrb[0].mxu0
    %115 = vmatprep.mubr.f32.mxu0 0.0
    %116 = vmatmul.mubr.f32.gmra.mrb[0].mxu0 %v36
    %v117 = vpop.f32.mrb[0].mxu0
    %v118 = vadd.f32 %v27, %v117
    %v119 = vpop.f32.mrb[0].mxu0
    %120 = vmatprep.mubr.f32.mxu0 0.0
    %121 = vmatmul.mubr.f32.gmra.mrb[0].mxu0 %v39
    %v122 = vpop.f32.mrb[0].mxu0
    %v123 = vadd.f32 %v27, %v122
    %v124 = vpop.f32.mrb[0].mxu0
    %125 = vdwg.mxu0
    %vm126 = vcmask 261120
    %v127 = vsel %vm126, %v108, 0.0
    %128 = vadd.xlane.f32.xlu0 %v127
    %v129 = vpop.xlane.xlu0 %128
    %v130 = vsel %vm126, %v113, 0.0
    %131 = vadd.xlane.f32.xlu0 %v130
    %v132 = vpop.xlane.xlu0 %131
    %v133 = vsel %vm126, %v118, 0.0
    %134 = vadd.xlane.f32.xlu0 %v133
    %v135 = vpop.xlane.xlu0 %134
    %v136 = vsel %vm126, %v123, 0.0
    %137 = vadd.xlane.f32.xlu0 %v136
    %v138 = vpop.xlane.xlu0 %137
    %v139 = vrcp.pop 32.0
    %v140 = vmul.f32 %v129, %v139
    %v141 = vmul.f32 %v132, %v139
    %v142 = vmul.f32 %v135, %v139
    %v143 = vmul.f32 %v138, %v139
    %v144 = vsub.f32 %v108, %v140
    %v145 = vsub.f32 %v113, %v141
    %v146 = vsub.f32 %v118, %v142
    %v147 = vsub.f32 %v123, %v143
    %v148 = vmul.f32 %v144, %v144
    %v149 = vmul.f32 %v145, %v145
    %v150 = vmul.f32 %v146, %v146
    %v151 = vmul.f32 %v147, %v147
    %v152 = vsel %vm126, %v148, 0.0
    %153 = vadd.xlane.f32.xlu0 %v152
    %v154 = vpop.xlane.xlu0 %153
    %v155 = vsel %vm126, %v149, 0.0
    %156 = vadd.xlane.f32.xlu0 %v155
    %v157 = vpop.xlane.xlu0 %156
    %v158 = vsel %vm126, %v150, 0.0
    %159 = vadd.xlane.f32.xlu0 %v158
    %v160 = vpop.xlane.xlu0 %159
    %v161 = vsel %vm126, %v151, 0.0
    %162 = vadd.xlane.f32.xlu0 %v161
    %v163 = vpop.xlane.xlu0 %162
    %v164 = vmul.f32 %v154, %v139
    %v165 = vmul.f32 %v157, %v139
    %v166 = vmul.f32 %v160, %v139
    %v167 = vmul.f32 %v163, %v139
    %v168 = vadd.f32 %v164, 1e-05
    %v169 = vadd.f32 %v165, 1e-05
    %v170 = vadd.f32 %v166, 1e-05
    %v171 = vadd.f32 %v167, 1e-05
    %v172 = vrsqrt.pop %v168
    %v173 = vrsqrt.pop %v169
    %v174 = vrsqrt.pop %v170
    %v175 = vrsqrt.pop %v171
    %v176 = vmul.f32 %v144, %v172
    %v177 = vmul.f32 %v145, %v173
    %v178 = vmul.f32 %v146, %v174
    %v179 = vmul.f32 %v147, %v175
    %v180 = vlaneseq
    %v181 = vshrl.u32 %v180, 7
    %v182 = vsub.s32 0, %v181
    %v183 = vrot.slane %v16, %v182
    %v184 = vmul.f32 %v176, %v183
    %v185 = vmul.f32 %v177, %v183
    %v186 = vmul.f32 %v178, %v183
    %v187 = vmul.f32 %v179, %v183
    %v188 = vlaneseq
    %v189 = vshrl.u32 %v188, 7
    %v190 = vsub.s32 0, %v189
    %v191 = vrot.slane %v17, %v190
    %v192 = vadd.f32 %v184, %v191
    %v193 = vadd.f32 %v185, %v191
    %v194 = vadd.f32 %v186, %v191
    %v195 = vadd.f32 %v187, %v191
    %v196 = vmax.f32 %v192, 0.0
    %v197 = vmax.f32 %v193, 0.0
    %v198 = vmax.f32 %v194, 0.0
    %v199 = vmax.f32 %v195, 0.0
    %v200 = vsel %vm126, %v196, -inf
    %v201 = vrot.slane %v200, 4
    %v202 = vmax.f32 %v200, %v201
    %v203 = vrot.slane %v202, 2
    %v204 = vmax.f32 %v202, %v203
    %v205 = vrot.slane %v204, 1
    %v206 = vmax.f32 %v204, %v205
    %v207 = vsel %vm126, %v197, -inf
    %v208 = vrot.slane %v207, 4
    %v209 = vmax.f32 %v207, %v208
    %v210 = vrot.slane %v209, 2
    %v211 = vmax.f32 %v209, %v210
    %v212 = vrot.slane %v211, 1
    %v213 = vmax.f32 %v211, %v212
    %v214 = vsel %vm126, %v198, -inf
    %v215 = vrot.slane %v214, 4
    %v216 = vmax.f32 %v214, %v215
    %v217 = vrot.slane %v216, 2
    %v218 = vmax.f32 %v216, %v217
    %v219 = vrot.slane %v218, 1
    %v220 = vmax.f32 %v218, %v219
    %v221 = vsel %vm126, %v199, -inf
    %v222 = vrot.slane %v221, 4
    %v223 = vmax.f32 %v221, %v222
    %v224 = vrot.slane %v223, 2
    %v225 = vmax.f32 %v223, %v224
    %v226 = vrot.slane %v225, 1
    %v227 = vmax.f32 %v225, %v226
    %232 = vrot.lane.b32.xlu0 %v196, 32
    %v233 = vpop.permute.xlu0 %232
    %234 = vrot.lane.b32.xlu0 %v197, 32
    %v235 = vpop.permute.xlu0 %234
    %236 = vrot.lane.b32.xlu0 %v198, 32
    %v237 = vpop.permute.xlu0 %236
    %238 = vrot.lane.b32.xlu0 %v199, 32
    %v239 = vpop.permute.xlu0 %238
    %v244 = vsel %vm126, %v206, %v233
    %v245 = vsel %vm126, %v213, %v235
    %v246 = vsel %vm126, %v220, %v237
    %v247 = vsel %vm126, %v227, %v239
    %v248 = vcombine.low %v244, %v246
    %v249 = vcombine.high %v244, %v246
    %v251 = vunpack.c.l.s4 1983009808
    %v252 = vunpack.c.0.s8 %v251
    %v253 = vlaneseq
    %v254 = vshrl.u32 %v253, 7
    %v255 = vsub.s32 %v252, %v254
    %v256 = vrot.slane %v248, %v255
    %v258 = vunpack.c.l.s4 1983009808
    %v259 = vunpack.c.0.s8 %v258
    %v260 = vlaneseq
    %v261 = vshrl.u32 %v260, 7
    %v262 = vsub.s32 %v259, %v261
    %v263 = vrot.slane %v249, %v262
    %v264 = vcombine.low %v245, %v247
    %v265 = vcombine.high %v245, %v247
    %v267 = vunpack.c.l.s4 1983009808
    %v268 = vunpack.c.0.s8 %v267
    %v269 = vlaneseq
    %v270 = vshrl.u32 %v269, 7
    %v271 = vsub.s32 %v268, %v270
    %v272 = vrot.slane %v264, %v271
    %v274 = vunpack.c.l.s4 1983009808
    %v275 = vunpack.c.0.s8 %v274
    %v276 = vlaneseq
    %v277 = vshrl.u32 %v276, 7
    %v278 = vsub.s32 %v275, %v277
    %v279 = vrot.slane %v265, %v278
    %v280 = vcombine.low %v256, %v272
    %v281 = vcombine.high %v256, %v272
    %v283 = vunpack.c.l.s4 1934713408
    %v284 = vunpack.c.0.s8 %v283
    %v285 = vlaneseq
    %v286 = vshrl.u32 %v285, 7
    %v287 = vsub.s32 %v284, %v286
    %v288 = vrot.slane %v280, %v287
    %v290 = vunpack.c.l.s4 1934713408
    %v291 = vunpack.c.0.s8 %v290
    %v292 = vlaneseq
    %v293 = vshrl.u32 %v292, 7
    %v294 = vsub.s32 %v291, %v293
    %v295 = vrot.slane %v281, %v294
    %v296 = vcombine.low %v263, %v279
    %v297 = vcombine.high %v263, %v279
    %v299 = vunpack.c.l.s4 1934713408
    %v300 = vunpack.c.0.s8 %v299
    %v301 = vlaneseq
    %v302 = vshrl.u32 %v301, 7
    %v303 = vsub.s32 %v300, %v302
    %v304 = vrot.slane %v296, %v303
    %v306 = vunpack.c.l.s4 1934713408
    %v307 = vunpack.c.0.s8 %v306
    %v308 = vlaneseq
    %v309 = vshrl.u32 %v308, 7
    %v310 = vsub.s32 %v307, %v309
    %v311 = vrot.slane %v297, %v310
    %v312 = vcombine.high %v288, 0.0
    %v313 = vcombine.high %v295, 0.0
    %v314 = vcombine.high %v304, 0.0
    %v315 = vcombine.high %v311, 0.0
    %317 = vrot.lane.b32.xlu0 %v312, 64
    %v318 = vpop.permute.xlu0 %317
    %321 = vrot.lane.b32.xlu0 %v313, 64
    %v322 = vpop.permute.xlu0 %321
    %325 = vrot.lane.b32.xlu0 %v314, 64
    %v326 = vpop.permute.xlu0 %325
    %329 = vrot.lane.b32.xlu0 %v315, 64
    %v330 = vpop.permute.xlu0 %329
    %vm332 = vcmask 523264
    %v333 = vsel %vm332, %v288, %v318
    %v334 = vsel %vm332, %v295, %v322
    %v335 = vsel %vm332, %v304, %v326
    %v336 = vsel %vm332, %v311, %v330
    %v341 = vcombine.low %v333, %v334
    %v342 = vcombine.low %v335, %v336
    %345 = vst [vmem:[#allocation2] sm:$0xff] %v341
    %346 = vst [vmem:[#allocation2 + $0x8] sm:$0xff] %v342
    // Predicated region
    $region14: #{tpu_custom_call.1} parent=1 // pred_check
      _
    $region15: #{tpu_custom_call.1} parent=1 // pred_check_branch
      %348 = sbr.rel (0) target = $region17
    $region16: #{tpu_custom_call.1} parent=1 // pred_region
      %s350 = ssub.s32 256, 256
      %351 = vsyncadd [#allocation3], %s350
      %s353 = sshll.u32 [#allocation2], 4
      %s354 = int_to_ptr.vmem [resolvable:$true] %s353
      %356 = dma.vmem_to_hbm [thread:$0]  %s354, 256, %s3, [#allocation3]
    $region17: #{tpu_custom_call.1} parent=1 // pred_fallthru
      _
    // Predicated region
    $region18: #{tpu_custom_call.1} parent=1 // pred_check
      _
    $region19: #{tpu_custom_call.1} parent=1 // pred_check_branch
      %358 = sbr.rel (0) target = $region21
    $region20: #{tpu_custom_call.1} parent=1 // pred_region
      %359 = dma.done [#allocation3], 256
    $region21: #{tpu_custom_call.1} parent=1 // pred_fallthru
      _
    %360 = vsyncpa [#allocation3], 1

</llo_original>
